<compile_context>
chip_gen: v6e
topology: v6e:2x2x1
jax: 0.10.0
libtpu: 0.0.40
codegen_flags: <defaults>
</compile_context>

<pallas_src>
import math
import numpy as np
import jax
import jax.numpy as jnp
from jax.experimental import pallas as pl
from jax.experimental.pallas import tpu as pltpu

_LANE = 128
_GRID = 2  # split output columns in two "parallel" steps (v7x megacore friendly)


def _bilinear_matrix(in_size: int, out_size: int) -> np.ndarray:
    """W (out_size, in_size) s.t. W @ v is a bilinear, align_corners=True resize
    of axis 0 (torch/kornia convention). Rows sum to 1."""
    W = np.zeros((out_size, in_size), dtype=np.float32)
    if out_size == 1 or in_size == 1:
        W[:, 0] = 1.0
        return W
    src = np.arange(out_size, dtype=np.float64) * (in_size - 1) / (out_size - 1)
    i0 = np.clip(np.floor(src).astype(np.int64), 0, in_size - 2)
    frac = (src - i0).astype(np.float32)
    rows = np.arange(out_size)
    W[rows, i0] += 1.0 - frac
    W[rows, i0 + 1] += frac
    return W


def _resize_affine_kernel(x_ref, wxt_ref, wy_ref, shift_ref, o_ref):
    # x: (H, Cpad*W)  wxt: (Cpad*W, NB)  wy: (OH, H)  shift: (1, NB)  o: (OH, NB)
    # wxt already carries the per-channel 1/std factor.
    t = jnp.dot(x_ref[...], wxt_ref[...], preferred_element_type=jnp.float32)  # (H, NB)
    r = jnp.dot(wy_ref[...], t, preferred_element_type=jnp.float32)            # (OH, NB)
    # post-resize per-channel shift (-mean/std), lane-aligned rows
    o_ref[...] = (r + shift_ref[...]).astype(o_ref.dtype)


def normalize_and_resize(x_all, mean, std, out_size):
    """x_all: (Ctot, H, W) -> (Ctot, OH, OW) f32: per-channel normalize + bilinear
    align_corners=True resize, in a single fused Pallas call."""
    Ctot, H, W = x_all.shape
    OH, OW = out_size

    # pad channel count so the wide output width Cpad*OW splits into _GRID
    # fully lane-dense (multiple-of-128) column blocks.
    unit = (_GRID * _LANE) // math.gcd(OW, _GRID * _LANE)
    Cpad = ((Ctot + unit - 1) // unit) * unit
    ncol = Cpad * OW
    nb = ncol // _GRID

    # host-side constants
    wy = _bilinear_matrix(H, OH)                                  # (OH, H)
    wxt = _bilinear_matrix(W, OW).T                               # (W, OW)

    mean = np.asarray(mean, np.float32)
    std = np.asarray(std, np.float32)
    scale = np.ones((Cpad,), np.float32)
    shift = np.zeros((Cpad,), np.float32)
    scale[:Ctot] = 1.0 / std
    shift[:Ctot] = -mean / std

    # block-diagonal Wx^T with the per-channel 1/std folded in (host-side)
    wxt_bd = np.kron(np.diag(scale).astype(np.float32), wxt)      # (Cpad*W, Cpad*OW)
    shift_row = np.repeat(shift, OW)[None, :]                     # (1, Cpad*OW)

    # channels-wide input layout: x_wide[h, c*W + w] = x_all[c, h, w]
    x_wide = jnp.transpose(x_all.astype(jnp.float32), (1, 0, 2)).reshape(H, Ctot * W)
    if Cpad > Ctot:
        x_wide = jnp.pad(x_wide, ((0, 0), (0, (Cpad - Ctot) * W)))

    out_wide = pl.pallas_call(
        _resize_affine_kernel,
        out_shape=jax.ShapeDtypeStruct((OH, ncol), jnp.float32),
        grid_spec=pltpu.PrefetchScalarGridSpec(
            num_scalar_prefetch=0,
            grid=(_GRID,),
            in_specs=[
                pl.BlockSpec((H, Cpad * W), lambda g: (0, 0)),    # input slab (constant across grid)
                pl.BlockSpec((Cpad * W, nb), lambda g: (0, g)),   # scaled blockdiag Wx^T, column half
                pl.BlockSpec((OH, H), lambda g: (0, 0)),          # Wy (constant across grid)
                pl.BlockSpec((1, nb), lambda g: (0, g)),          # per-channel shift row
            ],
            out_specs=pl.BlockSpec((OH, nb), lambda g: (0, g)),   # 128-lane-aligned stores
        ),
        compiler_params=pltpu.CompilerParams(
            dimension_semantics=("parallel",)),
    )(x_wide, jnp.asarray(wxt_bd), jnp.asarray(wy), jnp.asarray(shift_row))

    # layout plumbing back to (C, OH, OW) in the wrapper (cheap XLA ops)
    out = out_wide.reshape(OH, Cpad, OW).transpose(1, 0, 2)
    return out[:Ctot]


def reg_data_augmentation(batch, band_stats, target_stats, size):
    """Eval-split forward of RegDataAugmentation.

    batch: {'image': (C,H,W), 'groundtruth': (1,H,W), 'meta': any}
    returns (x_out (C,OH,OW), target_out (1,OH,OW), meta)
    """
    x = batch["image"]
    target = batch["groundtruth"]
    C = x.shape[0]
    x_all = jnp.concatenate([x.astype(jnp.float32), target.astype(jnp.float32)], axis=0)
    mean = list(band_stats["mean"]) + list(target_stats["mean"])
    std = list(band_stats["std"]) + list(target_stats["std"])
    out = normalize_and_resize(x_all, mean, std, size)
    return out[:C], out[C:], batch["meta"]


def _reference(x, mean, std, out_size):
    C, H, W = x.shape
    OH, OW = out_size
    wy = jnp.asarray(_bilinear_matrix(H, OH))
    wx = jnp.asarray(_bilinear_matrix(W, OW))
    xn = (x - jnp.asarray(mean, jnp.float32).reshape(C, 1, 1)) / \
         jnp.asarray(std, jnp.float32).reshape(C, 1, 1)
    return jnp.einsum("oh,chw,pw->cop", wy, xn, wx)


if __name__ == "__main__":
    key = jax.random.PRNGKey(0)
    k_img, k_tgt = jax.random.split(key)

    C, H, W = 4, 16, 16
    size = (32, 32)

    image = jax.random.normal(k_img, (C, H, W), dtype=jnp.float32) * 3.0 + 1.0
    groundtruth = jax.random.normal(k_tgt, (1, H, W), dtype=jnp.float32) * 0.5

    band_stats = {
        "mean": [0.1 * i for i in range(C)],
        "std": [1.0 + 0.05 * i for i in range(C)],
    }
    target_stats = {"mean": [0.25], "std": [2.0]}
    batch = {"image": image, "groundtruth": groundtruth, "meta": {"id": 0}}

    x_out, t_out, meta = reg_data_augmentation(batch, band_stats, target_stats, size)
    jax.block_until_ready((x_out, t_out))

    # sanity-check against a pure-JAX reference of the same math
    x_ref = _reference(image, band_stats["mean"], band_stats["std"], size)
    t_ref = _reference(groundtruth, target_stats["mean"], target_stats["std"], size)
    assert x_out.shape == (C, size[0], size[1])
    assert t_out.shape == (1, size[0], size[1])
    np.testing.assert_allclose(np.asarray(x_out), np.asarray(x_ref), rtol=1e-5, atol=5e-5)
    np.testing.assert_allclose(np.asarray(t_out), np.asarray(t_ref), rtol=1e-5, atol=5e-5)

    print("KERNEL_OK")
</pallas_src>

<mosaic_0001>
module attributes {stable_mosaic.version = 11 : i64} {
  func.func @_resize_affine_kernel(%arg0: i32, %arg1: memref<16x128xf32, #tpu.memory_space<vmem>>, %arg2: memref<128x128xf32, #tpu.memory_space<vmem>>, %arg3: memref<32x16xf32, #tpu.memory_space<vmem>>, %arg4: memref<1x128xf32, #tpu.memory_space<vmem>>, %arg5: memref<32x128xf32, #tpu.memory_space<vmem>>) attributes {dimension_semantics = [#tpu.dimension_semantics<parallel>], iteration_bounds = array<i64: 2>, scalar_prefetch = 0 : i64, scratch_operands = 0 : i64, tpu.core_type = #tpu.core_type<tc>, window_params = [{pipeline_mode = #tpu.pipeline_mode<synchronous>, transform_indices = @transform_0, window_bounds = array<i64: 16, 128>}, {transform_indices = @transform_1, window_bounds = array<i64: 128, 128>}, {pipeline_mode = #tpu.pipeline_mode<synchronous>, transform_indices = @transform_2, window_bounds = array<i64: 32, 16>}, {transform_indices = @transform_3, window_bounds = array<i64: 1, 128>}, {transform_indices = @transform_4, window_bounds = array<i64: 32, 128>}]} {
    %c0 = arith.constant 0 : index
    %c0_0 = arith.constant 0 : index
    %0 = vector.load %arg1[%c0, %c0_0] : memref<16x128xf32, #tpu.memory_space<vmem>>, vector<16x128xf32>
    %c0_1 = arith.constant 0 : index
    %c0_2 = arith.constant 0 : index
    %1 = vector.load %arg2[%c0_1, %c0_2] : memref<128x128xf32, #tpu.memory_space<vmem>>, vector<128x128xf32>
    %cst = arith.constant dense<0.000000e+00> : vector<16x128xf32>
    %2 = tpu.matmul %0, %1, %cst {dimension_numbers = #tpu.dot_dimension_numbers<[1], [0], [0], [1], [0, 0, 1, 1], [], []>} : vector<16x128xf32>, vector<128x128xf32>, vector<16x128xf32> -> vector<16x128xf32>
    %c0_3 = arith.constant 0 : index
    %c0_4 = arith.constant 0 : index
    %3 = vector.load %arg3[%c0_3, %c0_4] : memref<32x16xf32, #tpu.memory_space<vmem>>, vector<32x16xf32>
    %cst_5 = arith.constant dense<0.000000e+00> : vector<32x128xf32>
    %4 = tpu.matmul %3, %2, %cst_5 {dimension_numbers = #tpu.dot_dimension_numbers<[1], [0], [0], [1], [0, 0, 1, 1], [], []>} : vector<32x16xf32>, vector<16x128xf32>, vector<32x128xf32> -> vector<32x128xf32>
    %c0_6 = arith.constant 0 : index
    %c0_7 = arith.constant 0 : index
    %5 = vector.load %arg4[%c0_6, %c0_7] : memref<1x128xf32, #tpu.memory_space<vmem>>, vector<1x128xf32>
    %6 = vector.broadcast %5 : vector<1x128xf32> to vector<32x128xf32>
    %7 = arith.addf %4, %6 : vector<32x128xf32>
    %c0_8 = arith.constant 0 : index
    %c0_9 = arith.constant 0 : index
    %8 = vector.load %arg5[%c0_8, %c0_9] : memref<32x128xf32, #tpu.memory_space<vmem>>, vector<32x128xf32>
    tpu.vector_store %arg5[%c0_8, %c0_9], %7 {strides = array<i32>} : memref<32x128xf32, #tpu.memory_space<vmem>>, vector<32x128xf32>,
    return
  }
  func.func @transform_0(%arg0: i32) -> (i32, i32) {
    %c0_i32 = arith.constant 0 : i32
    %c0_i32_0 = arith.constant 0 : i32
    %c0_i32_1 = arith.constant 0 : i32
    return %c0_i32, %c0_i32_0 : i32, i32
  }
  func.func @transform_1(%arg0: i32) -> (i32, i32) {
    %c0_i32 = arith.constant 0 : i32
    %c0_i32_0 = arith.constant 0 : i32
    return %c0_i32, %arg0 : i32, i32
  }
  func.func @transform_2(%arg0: i32) -> (i32, i32) {
    %c0_i32 = arith.constant 0 : i32
    %c0_i32_0 = arith.constant 0 : i32
    %c0_i32_1 = arith.constant 0 : i32
    return %c0_i32, %c0_i32_0 : i32, i32
  }
  func.func @transform_3(%arg0: i32) -> (i32, i32) {
    %c0_i32 = arith.constant 0 : i32
    %c0_i32_0 = arith.constant 0 : i32
    return %c0_i32, %arg0 : i32, i32
  }
  func.func @transform_4(%arg0: i32) -> (i32, i32) {
    %c0_i32 = arith.constant 0 : i32
    %c0_i32_0 = arith.constant 0 : i32
    return %c0_i32, %arg0 : i32, i32
  }
}

</mosaic_0001>

<llo_original>
// kernel: tpu_custom_call.1
$region0: #{tpu_custom_call.1}
  #allocation0 [shape = 'u32[]', space=smem, size = 0x4, offset = 0x4, fixed_abs, tag = 'smem constant byte address 0x4 - core index']
  #allocation1 [shape = 'u32[144,128]{1,0:T(1,128)}', space=vmem, size = 0x12000, scoped, tag = 'internal scratch']
  %s0 = inlined_call_operand.vmem [shape: f32[16,128], index: 0, kind: input, shape index: {}]
  %s1 = inlined_call_operand.hbm [shape: f32[128,256], index: 1, kind: input, shape index: {}]
  %s2 = inlined_call_operand.vmem [shape: f32[32,16], index: 2, kind: input, shape index: {}]
  %s3 = inlined_call_operand.vmem [shape: f32[1,256], index: 3, kind: input, shape index: {}]
  %s4 = inlined_call_operand.hbm [shape: f32[32,256], index: 4, kind: output, shape index: {}]
  %s5 = sld [smem:[#allocation0]]
  $region53: #{tpu_custom_call.1} parent=0
    _
  %s7 = ssub.s32 1, %s5
  %s8 = scalar_select 0, %s7, %s5
  $region1: #{tpu_custom_call.1} parent=0
    #allocation2 [shape = 'u8[131072]{0}', space=vmem, size = 0x20000, scoped, tag = 'input window, operand 1']
    #allocation3 [shape = 's32[2]{0}', space=sflag, size = 0x8, scoped, tag = 'scoped memory for tpu_custom_call.1']
    #allocation4 [shape = 's32[2]{0}', space=sflag, size = 0x8, scoped, tag = 'scoped memory for tpu_custom_call.1']
    #allocation5 [shape = 'u8[32768]{0}', space=vmem, size = 0x8000, scoped, tag = 'output window, operand 0']
    %9 = vsyncpa [#allocation3], 0
    %s10 = scalar_lea.sflag [#allocation3], 1
    %11 = vsyncpa %s10, 0
    %12 = vsyncpa [#allocation4], 0
    %s13 = scalar_lea.sflag [#allocation4], 1
    %14 = vsyncpa %s13, 0
    loop: start=0, step=1, limit=4
    $region2: #{tpu_custom_call.1} parent=1 // loop_pre_header
      _
    $region3: #{tpu_custom_call.1} parent=1 // loop_header
      %s16 = sphi 0, %s20
      %p17 = scmp.ge.s32.totalorder %s16, 4
      %s24 = sphi 0, %s24
      %s26 = sphi 0, %s24
      %s27 = sphi 0, %s26
      %s41 = sphi 0, %s27
      %s47 = sphi 0, %s49
      %s50 = sphi 0, %s47
      %s51 = sphi 0, %s50
      %s67 = sphi 0, %s51
      %s71 = sphi 0, %s71
      %s73 = sphi 0, %s71
      %s74 = sphi 0, %s73
      %s88 = sphi 0, %s74
      %s94 = sphi 0, %s96
      %s97 = sphi 0, %s94
      %s98 = sphi 0, %s97
      %s114 = sphi 0, %s98
      %s120 = sphi 0, %s122
      %s123 = sphi 0, %s120
      %s124 = sphi 0, %s123
      %s140 = sphi 0, %s124
    $region4: #{tpu_custom_call.1} parent=1 // loop_header_branch
      %19 = sbr.rel (%p17) target = $region8
    $region5: #{tpu_custom_call.1} parent=1 // loop_body
      %s21 = ssub.s32 %s16, 1
      %s22 = ssub.s32 %s16, 2
      %s23 = sadd.s32 %s16, 1
      %s25 = sadd.s32 %s24, 1
      %p28 = scmp.eq.s32.totalorder %s16, 1
      %p29 = scmp.ne.s32.totalorder %s24, %s26
      %p30 = scmp.eq.s32.totalorder %s16, 0
      %p31 = por %p29, %p30
      %p32 = scmp.ne.s32.totalorder %s24, %s26
      %p33 = scmp.eq.s32.totalorder %s21, 1
      %p34 = por %p32, %p33
      %p35 = scmp.ne.s32.totalorder %s26, %s27
      %p36 = scmp.eq.s32.totalorder %s21, 0
      %p37 = por %p35, %p36
      %p38 = scmp.ne.s32.totalorder %s26, %s27
      %p39 = scmp.eq.s32.totalorder %s22, 1
      %p40 = por %p38, %p39
      %p42 = scmp.ne.s32.totalorder %s27, %s41
      %p43 = scmp.eq.s32.totalorder %s22, 0
      %p44 = por %p42, %p43
      %s45 = ssub.s32 %s16, %s23
      %p46 = scmp.eq.s32.totalorder %s45, 0
      %s48 = sadd.s32 %s47, 1
      %s49 = scalar_select %p46, %s47, %s48
      %p52 = pneg %p46
      %p53 = scmp.eq.s32.totalorder %s16, 1
      %p54 = por %p52, %p53
      %p55 = scmp.ne.s32.totalorder %s47, %s50
      %p56 = scmp.eq.s32.totalorder %s16, 0
      %p57 = por %p55, %p56
      %p58 = scmp.ne.s32.totalorder %s47, %s50
      %p59 = scmp.eq.s32.totalorder %s21, 1
      %p60 = por %p58, %p59
      %p61 = scmp.ne.s32.totalorder %s50, %s51
      %p62 = scmp.eq.s32.totalorder %s21, 0
      %p63 = por %p61, %p62
      %p64 = scmp.ne.s32.totalorder %s50, %s51
      %p65 = scmp.eq.s32.totalorder %s22, 1
      %p66 = por %p64, %p65
      %p68 = scmp.ne.s32.totalorder %s51, %s67
      %p69 = scmp.eq.s32.totalorder %s22, 0
      %p70 = por %p68, %p69
      %s72 = sadd.s32 %s71, 1
      %p75 = scmp.eq.s32.totalorder %s16, 1
      %p76 = scmp.ne.s32.totalorder %s71, %s73
      %p77 = scmp.eq.s32.totalorder %s16, 0
      %p78 = por %p76, %p77
      %p79 = scmp.ne.s32.totalorder %s71, %s73
      %p80 = scmp.eq.s32.totalorder %s21, 1
      %p81 = por %p79, %p80
      %p82 = scmp.ne.s32.totalorder %s73, %s74
      %p83 = scmp.eq.s32.totalorder %s21, 0
      %p84 = por %p82, %p83
      %p85 = scmp.ne.s32.totalorder %s73, %s74
      %p86 = scmp.eq.s32.totalorder %s22, 1
      %p87 = por %p85, %p86
      %p89 = scmp.ne.s32.totalorder %s74, %s88
      %p90 = scmp.eq.s32.totalorder %s22, 0
      %p91 = por %p89, %p90
      %s92 = ssub.s32 %s16, %s23
      %p93 = scmp.eq.s32.totalorder %s92, 0
      %s95 = sadd.s32 %s94, 1
      %s96 = scalar_select %p93, %s94, %s95
      %p99 = pneg %p93
      %p100 = scmp.eq.s32.totalorder %s16, 1
      %p101 = por %p99, %p100
      %p102 = scmp.ne.s32.totalorder %s94, %s97
      %p103 = scmp.eq.s32.totalorder %s16, 0
      %p104 = por %p102, %p103
      %p105 = scmp.ne.s32.totalorder %s94, %s97
      %p106 = scmp.eq.s32.totalorder %s21, 1
      %p107 = por %p105, %p106
      %p108 = scmp.ne.s32.totalorder %s97, %s98
      %p109 = scmp.eq.s32.totalorder %s21, 0
      %p110 = por %p108, %p109
      %p111 = scmp.ne.s32.totalorder %s97, %s98
      %p112 = scmp.eq.s32.totalorder %s22, 1
      %p113 = por %p111, %p112
      %p115 = scmp.ne.s32.totalorder %s98, %s114
      %p116 = scmp.eq.s32.totalorder %s22, 0
      %p117 = por %p115, %p116
      %s118 = ssub.s32 %s16, %s23
      %p119 = scmp.eq.s32.totalorder %s118, 0
      %s121 = sadd.s32 %s120, 1
      %s122 = scalar_select %p119, %s120, %s121
      %p125 = pneg %p119
      %p126 = scmp.eq.s32.totalorder %s16, 1
      %p127 = por %p125, %p126
      %p128 = scmp.ne.s32.totalorder %s120, %s123
      %p129 = scmp.eq.s32.totalorder %s16, 0
      %p130 = por %p128, %p129
      %p131 = scmp.ne.s32.totalorder %s120, %s123
      %p132 = scmp.eq.s32.totalorder %s21, 1
      %p133 = por %p131, %p132
      %p134 = scmp.ne.s32.totalorder %s123, %s124
      %p135 = scmp.eq.s32.totalorder %s21, 0
      %p136 = por %p134, %p135
      %p137 = scmp.ne.s32.totalorder %s123, %s124
      %p138 = scmp.eq.s32.totalorder %s22, 1
      %p139 = por %p137, %p138
      %p141 = scmp.ne.s32.totalorder %s124, %s140
      %p142 = scmp.eq.s32.totalorder %s22, 0
      %p143 = por %p141, %p142
      %p144 = scmp.le.s32.totalorder 1, %s16
      %p145 = scmp.lt.s32.totalorder %s16, 3
      %p146 = pnand %p144, %p145
      %p147 = pneg %p146
      // Predicated region
      $region9: #{tpu_custom_call.1} parent=5 // pred_check
        _
      $region10: #{tpu_custom_call.1} parent=5 // pred_check_branch
        %149 = sbr.rel (%p146) target = $region12
      $region11: #{tpu_custom_call.1} parent=5 // pred_region
        %s150 = ssub.s32 %s16, 1
        // Predicated region
        $region13: #{tpu_custom_call.1} parent=11 // pred_check
          %p151 = pneg %p37
        $region14: #{tpu_custom_call.1} parent=11 // pred_check_branch
          %153 = sbr.rel (%p151) target = $region16
        $region15: #{tpu_custom_call.1} parent=11 // pred_region
          _
        $region16: #{tpu_custom_call.1} parent=11 // pred_fallthru
          _
        // Predicated region
        $region17: #{tpu_custom_call.1} parent=11 // pred_check
          %p154 = pneg %p84
        $region18: #{tpu_custom_call.1} parent=11 // pred_check_branch
          %156 = sbr.rel (%p154) target = $region20
        $region19: #{tpu_custom_call.1} parent=11 // pred_region
          _
        $region20: #{tpu_custom_call.1} parent=11 // pred_fallthru
          _
      $region12: #{tpu_custom_call.1} parent=5 // pred_fallthru
        _
      %p157 = scmp.lt.s32.totalorder %s16, 2
      // Predicated region
      $region21: #{tpu_custom_call.1} parent=5 // pred_check
        %p158 = pneg %p157
      $region22: #{tpu_custom_call.1} parent=5 // pred_check_branch
        %160 = sbr.rel (%p158) target = $region24
      $region23: #{tpu_custom_call.1} parent=5 // pred_region
        // Predicated region
        $region25: #{tpu_custom_call.1} parent=23 // pred_check
          %p161 = pneg %p57
        $region26: #{tpu_custom_call.1} parent=23 // pred_check_branch
          %163 = sbr.rel (%p161) target = $region28
        $region27: #{tpu_custom_call.1} parent=23 // pred_region
          %s164 = sand.u32 %s47, 1
          %s165 = scalar_lea.sflag [#allocation3], %s164
          %s166 = sand.u32 %s47, 1
          %s167 = smul.addr %s166, 128
          %s168 = scalar_lea.vmem [#allocation2], %s167
          %s170 = ssub.s32 2048, 2048
          %171 = vsyncadd %s165, %s170
          %s172 = smul.addr %s16, 128
          %s173 = scalar_lea.hbm %s1, %s172
          %s174 = sshll.u32 %s168, 4
          %s175 = int_to_ptr.vmem [resolvable:$true] %s174
          %180 = dma.hbm_to_vmem [thread:$0]  %s173, 2048, %s175, %s165, 256, 128, 8
        $region28: #{tpu_custom_call.1} parent=23 // pred_fallthru
          _
        // Predicated region
        $region29: #{tpu_custom_call.1} parent=23 // pred_check
          %p181 = pneg %p104
        $region30: #{tpu_custom_call.1} parent=23 // pred_check_branch
          %183 = sbr.rel (%p181) target = $region32
        $region31: #{tpu_custom_call.1} parent=23 // pred_region
          %p184 = scmp.lt.s32.totalorder %s16, 1
          %s185 = scalar_select %p184, %s16, 1
          %s186 = scalar_lea.vmem %s3, %s185
        $region32: #{tpu_custom_call.1} parent=23 // pred_fallthru
          _
      $region24: #{tpu_custom_call.1} parent=5 // pred_fallthru
        _
      %p187 = scmp.le.s32.totalorder 1, %s16
      %p188 = scmp.lt.s32.totalorder %s16, 3
      %p189 = pnand %p187, %p188
      %p190 = pneg %p189
      // Predicated region
      $region33: #{tpu_custom_call.1} parent=5 // pred_check
        _
      $region34: #{tpu_custom_call.1} parent=5 // pred_check_branch
        %192 = sbr.rel (%p189) target = $region36
      $region35: #{tpu_custom_call.1} parent=5 // pred_region
        %s193 = ssub.s32 %s16, 1
        %s194 = sand.u32 %s50, 1
        %s195 = scalar_lea.sflag [#allocation3], %s194
        %s196 = sand.u32 %s50, 1
        %s197 = smul.addr %s196, 128
        %s198 = scalar_lea.vmem [#allocation2], %s197
        // Predicated region
        $region37: #{tpu_custom_call.1} parent=35 // pred_check
          %p199 = pneg %p63
        $region38: #{tpu_custom_call.1} parent=35 // pred_check_branch
          %201 = sbr.rel (%p199) target = $region40
        $region39: #{tpu_custom_call.1} parent=35 // pred_region
          %202 = dma.done %s195, 2048
        $region40: #{tpu_custom_call.1} parent=35 // pred_fallthru
          _
        %p203 = pneg %p37
        %p204 = pneg %p34
        %s205 = sand.u32 %s50, 1
        %s206 = scalar_lea.sflag [#allocation3], %s205
        %s207 = sand.u32 %s50, 1
        %s208 = smul.addr %s207, 128
        %s209 = scalar_lea.vmem [#allocation2], %s208
        %p210 = pneg %p63
        %p211 = pneg %p60
        %p212 = pneg %p84
        %p213 = pneg %p81
        %p214 = scmp.lt.s32.totalorder %s21, 1
        %s215 = scalar_select %p214, %s21, 1
        %s216 = scalar_lea.vmem %s3, %s215
        %p217 = pneg %p110
        %p218 = pneg %p107
        %p219 = pneg %p136
        %p220 = pneg %p133
        %s221 = sand.u32 %s123, 1
        %s222 = scalar_lea.sflag [#allocation4], %s221
        %s223 = sand.u32 %s123, 1
        %s224 = smul.addr %s223, 32
        %s225 = scalar_lea.vmem [#allocation5], %s224
        %p226 = scmp.lt.s32.totalorder %s21, 1
        %s227 = scalar_select %p226, %s21, 1
        %s228 = scalar_lea.vmem %s3, %s227
        %v229 = vld [vmem:[%s0] sm:$0xff]
        %v230 = vld [vmem:[%s0 + $0x8] sm:$0xff]
        %v231 = vld [vmem:[%s198] sm:$0xff]
        %v232 = vld [vmem:[%s198 + $0x8] sm:$0xff]
        %v233 = vld [vmem:[%s198 + $0x10] sm:$0xff]
        %v234 = vld [vmem:[%s198 + $0x18] sm:$0xff]
        %v235 = vld [vmem:[%s198 + $0x20] sm:$0xff]
        %v236 = vld [vmem:[%s198 + $0x28] sm:$0xff]
        %v237 = vld [vmem:[%s198 + $0x30] sm:$0xff]
        %v238 = vld [vmem:[%s198 + $0x38] sm:$0xff]
        %v239 = vld [vmem:[%s198 + $0x40] sm:$0xff]
        %v240 = vld [vmem:[%s198 + $0x48] sm:$0xff]
        %v241 = vld [vmem:[%s198 + $0x50] sm:$0xff]
        %v242 = vld [vmem:[%s198 + $0x58] sm:$0xff]
        %v243 = vld [vmem:[%s198 + $0x60] sm:$0xff]
        %v244 = vld [vmem:[%s198 + $0x68] sm:$0xff]
        %v245 = vld [vmem:[%s198 + $0x70] sm:$0xff]
        %v246 = vld [vmem:[%s198 + $0x78] sm:$0xff]
        %247 = vmatprep.subr.mxu0 0.0
        %248 = vmatpush1.msra.mxu0 %v246
        %249 = vmatprep.subr.mxu0 0.0
        %250 = vmatpush1.msra.mxu0 %v245
        %251 = vmatprep.subr.mxu0 0.0
        %252 = vmatpush1.msra.mxu0 %v244
        %253 = vmatprep.subr.mxu0 0.0
        %254 = vmatpush1.msra.mxu0 %v243
        %255 = vmatprep.subr.mxu0 0.0
        %256 = vmatpush1.msra.mxu0 %v242
        %257 = vmatprep.subr.mxu0 0.0
        %258 = vmatpush1.msra.mxu0 %v241
        %259 = vmatprep.subr.mxu0 0.0
        %260 = vmatpush1.msra.mxu0 %v240
        %261 = vmatprep.subr.mxu0 0.0
        %262 = vmatpush1.msra.mxu0 %v239
        %263 = vmatprep.subr.mxu0 0.0
        %264 = vmatpush1.msra.mxu0 %v238
        %265 = vmatprep.subr.mxu0 0.0
        %266 = vmatpush1.msra.mxu0 %v237
        %267 = vmatprep.subr.mxu0 0.0
        %268 = vmatpush1.msra.mxu0 %v236
        %269 = vmatprep.subr.mxu0 0.0
        %270 = vmatpush1.msra.mxu0 %v235
        %271 = vmatprep.subr.mxu0 0.0
        %272 = vmatpush1.msra.mxu0 %v234
        %273 = vmatprep.subr.mxu0 0.0
        %274 = vmatpush1.msra.mxu0 %v233
        %275 = vmatprep.subr.mxu0 0.0
        %276 = vmatpush1.msra.mxu0 %v232
        %277 = vmatprep.subr.mxu0 0.0
        %278 = vmatpush1.msra.mxu0 %v231
        %279 = vmatprep.subr.mxu0 0.0
        %280 = vmatpush2.msra.mxu0 0.0
        %281 = vmatprep.subr.mxu0 0.0
        %282 = vmatpush2.msra.mxu0 0.0
        %283 = vmatprep.subr.mxu0 0.0
        %284 = vmatpush2.msra.mxu0 0.0
        %285 = vmatprep.subr.mxu0 0.0
        %286 = vmatpush2.msra.mxu0 0.0
        %287 = vmatprep.subr.mxu0 0.0
        %288 = vmatpush2.msra.mxu0 0.0
        %289 = vmatprep.subr.mxu0 0.0
        %290 = vmatpush2.msra.mxu0 0.0
        %291 = vmatprep.subr.mxu0 0.0
        %292 = vmatpush2.msra.mxu0 0.0
        %293 = vmatprep.subr.mxu0 0.0
        %294 = vmatpush2.msra.mxu0 0.0
        %295 = vmatprep.subr.mxu0 0.0
        %296 = vmatpush2.msra.mxu0 0.0
        %297 = vmatprep.subr.mxu0 0.0
        %298 = vmatpush2.msra.mxu0 0.0
        %299 = vmatprep.subr.mxu0 0.0
        %300 = vmatpush2.msra.mxu0 0.0
        %301 = vmatprep.subr.mxu0 0.0
        %302 = vmatpush2.msra.mxu0 0.0
        %303 = vmatprep.subr.mxu0 0.0
        %304 = vmatpush2.msra.mxu0 0.0
        %305 = vmatprep.subr.mxu0 0.0
        %306 = vmatpush2.msra.mxu0 0.0
        %307 = vmatprep.subr.mxu0 0.0
        %308 = vmatpush2.msra.mxu0 0.0
        %309 = vmatprep.subr.mxu0 0.0
        %310 = vmatpush2.msra.mxu0 0.0
        %311 = vmatprep.mubr.f32.mxu0 0.0
        %312 = vmatmul.mubr.f32.gmra.mxu0 %v229
        %v313 = vpop.f32.mrf.mxu0
        %v314 = vadd.f32 0.0, %v313
        %v315 = vpop.f32.mrf.mxu0
        %316 = vmatprep.mubr.f32.mxu0 0.0
        %317 = vmatmul.mubr.f32.gmra.mxu0 %v230
        %v318 = vpop.f32.mrf.mxu0
        %v319 = vadd.f32 0.0, %v318
        %v320 = vpop.f32.mrf.mxu0
        %321 = vdwg.mxu0
        %v322 = vld [vmem:[%s2] sm:$0xff]
        %v323 = vld [vmem:[%s2 + $0x8] sm:$0xff]
        %v324 = vld [vmem:[%s2 + $0x10] sm:$0xff]
        %v325 = vld [vmem:[%s2 + $0x18] sm:$0xff]
        %v326 = vld [vmem:[%s228] sm:$0x1]
        %v328 = vlaneseq
        %v329 = vshrl.u32 %v328, 7
        %v330 = vsub.s32 0, %v329
        %v331 = vrot.slane %v326, %v330
        %vm333 = vcmask 130048
        %v335 = vsel %vm333, %v322, 0
        %v338 = vsel %vm333, %v323, 0
        %v341 = vsel %vm333, %v324, 0
        %v344 = vsel %vm333, %v325, 0
        %346 = vmatprep.subr.mxu0 0.0
        %347 = vmatpush1.msra.mxu0 0.0
        %348 = vmatprep.subr.mxu0 0.0
        %349 = vmatpush1.msra.mxu0 0.0
        %350 = vmatprep.subr.mxu0 0.0
        %351 = vmatpush1.msra.mxu0 0.0
        %352 = vmatprep.subr.mxu0 0.0
        %353 = vmatpush1.msra.mxu0 0.0
        %354 = vmatprep.subr.mxu0 0.0
        %355 = vmatpush1.msra.mxu0 0.0
        %356 = vmatprep.subr.mxu0 0.0
        %357 = vmatpush1.msra.mxu0 0.0
        %358 = vmatprep.subr.mxu0 0.0
        %359 = vmatpush1.msra.mxu0 0.0
        %360 = vmatprep.subr.mxu0 0.0
        %361 = vmatpush1.msra.mxu0 0.0
        %362 = vmatprep.subr.mxu0 0.0
        %363 = vmatpush1.msra.mxu0 0.0
        %364 = vmatprep.subr.mxu0 0.0
        %365 = vmatpush1.msra.mxu0 0.0
        %366 = vmatprep.subr.mxu0 0.0
        %367 = vmatpush1.msra.mxu0 0.0
        %368 = vmatprep.subr.mxu0 0.0
        %369 = vmatpush1.msra.mxu0 0.0
        %370 = vmatprep.subr.mxu0 0.0
        %371 = vmatpush1.msra.mxu0 0.0
        %372 = vmatprep.subr.mxu0 0.0
        %373 = vmatpush1.msra.mxu0 0.0
        %374 = vmatprep.subr.mxu0 0.0
        %375 = vmatpush1.msra.mxu0 %v319
        %376 = vmatprep.subr.mxu0 0.0
        %377 = vmatpush1.msra.mxu0 %v314
        %378 = vmatprep.subr.mxu0 0.0
        %379 = vmatpush2.msra.mxu0 0.0
        %380 = vmatprep.subr.mxu0 0.0
        %381 = vmatpush2.msra.mxu0 0.0
        %382 = vmatprep.subr.mxu0 0.0
        %383 = vmatpush2.msra.mxu0 0.0
        %384 = vmatprep.subr.mxu0 0.0
        %385 = vmatpush2.msra.mxu0 0.0
        %386 = vmatprep.subr.mxu0 0.0
        %387 = vmatpush2.msra.mxu0 0.0
        %388 = vmatprep.subr.mxu0 0.0
        %389 = vmatpush2.msra.mxu0 0.0
        %390 = vmatprep.subr.mxu0 0.0
        %391 = vmatpush2.msra.mxu0 0.0
        %392 = vmatprep.subr.mxu0 0.0
        %393 = vmatpush2.msra.mxu0 0.0
        %394 = vmatprep.subr.mxu0 0.0
        %395 = vmatpush2.msra.mxu0 0.0
        %396 = vmatprep.subr.mxu0 0.0
        %397 = vmatpush2.msra.mxu0 0.0
        %398 = vmatprep.subr.mxu0 0.0
        %399 = vmatpush2.msra.mxu0 0.0
        %400 = vmatprep.subr.mxu0 0.0
        %401 = vmatpush2.msra.mxu0 0.0
        %402 = vmatprep.subr.mxu0 0.0
        %403 = vmatpush2.msra.mxu0 0.0
        %404 = vmatprep.subr.mxu0 0.0
        %405 = vmatpush2.msra.mxu0 0.0
        %406 = vmatprep.subr.mxu0 0.0
        %407 = vmatpush2.msra.mxu0 0.0
        %408 = vmatprep.subr.mxu0 0.0
        %409 = vmatpush2.msra.mxu0 0.0
        %410 = vmatprep.mubr.f32.mxu0 0.0
        %411 = vmatmul.mubr.f32.gmra.mxu0 %v335
        %v412 = vpop.f32.mrf.mxu0
        %v413 = vadd.f32 %v331, %v412
        %v414 = vpop.f32.mrf.mxu0
        %415 = vmatprep.mubr.f32.mxu0 0.0
        %416 = vmatmul.mubr.f32.gmra.mxu0 %v338
        %v417 = vpop.f32.mrf.mxu0
        %v418 = vadd.f32 %v331, %v417
        %v419 = vpop.f32.mrf.mxu0
        %420 = vmatprep.mubr.f32.mxu0 0.0
        %421 = vmatmul.mubr.f32.gmra.mxu0 %v341
        %v422 = vpop.f32.mrf.mxu0
        %v423 = vadd.f32 %v331, %v422
        %v424 = vpop.f32.mrf.mxu0
        %425 = vmatprep.mubr.f32.mxu0 0.0
        %426 = vmatmul.mubr.f32.gmra.mxu0 %v344
        %v427 = vpop.f32.mrf.mxu0
        %v428 = vadd.f32 %v331, %v427
        %v429 = vpop.f32.mrf.mxu0
        %430 = vdwg.mxu0
        %431 = vst [vmem:[%s225] sm:$0xff] %v413
        %432 = vst [vmem:[%s225 + $0x8] sm:$0xff] %v418
        %433 = vst [vmem:[%s225 + $0x10] sm:$0xff] %v423
        %434 = vst [vmem:[%s225 + $0x18] sm:$0xff] %v428
        %s435 = sand.u32 %s123, 1
        %s436 = scalar_lea.sflag [#allocation4], %s435
        %s437 = sand.u32 %s123, 1
        %s438 = smul.addr %s437, 32
        %s439 = scalar_lea.vmem [#allocation5], %s438
        // Predicated region
        $region41: #{tpu_custom_call.1} parent=35 // pred_check
          %p440 = pneg %p133
        $region42: #{tpu_custom_call.1} parent=35 // pred_check_branch
          %442 = sbr.rel (%p440) target = $region44
        $region43: #{tpu_custom_call.1} parent=35 // pred_region
          %s444 = ssub.s32 512, 512
          %445 = vsyncadd %s436, %s444
          %s446 = smul.addr %s21, 128
          %s447 = scalar_lea.hbm %s4, %s446
          %s448 = sshll.u32 %s439, 4
          %s449 = int_to_ptr.vmem [resolvable:$true] %s448
          %454 = dma.vmem_to_hbm [thread:$0]  %s449, 512, %s447, %s436, 128, 256, 8
        $region44: #{tpu_custom_call.1} parent=35 // pred_fallthru
          _
      $region36: #{tpu_custom_call.1} parent=5 // pred_fallthru
        _
      %p455 = scmp.le.s32.totalorder 2, %s16
      // Predicated region
      $region45: #{tpu_custom_call.1} parent=5 // pred_check
        %p456 = pneg %p455
      $region46: #{tpu_custom_call.1} parent=5 // pred_check_branch
        %458 = sbr.rel (%p456) target = $region48
      $region47: #{tpu_custom_call.1} parent=5 // pred_region
        %s459 = ssub.s32 %s16, 2
        // Predicated region
        $region49: #{tpu_custom_call.1} parent=47 // pred_check
          %p460 = pneg %p139
        $region50: #{tpu_custom_call.1} parent=47 // pred_check_branch
          %462 = sbr.rel (%p460) target = $region52
        $region51: #{tpu_custom_call.1} parent=47 // pred_region
          %s463 = sand.u32 %s124, 1
          %s464 = scalar_lea.sflag [#allocation4], %s463
          %s465 = sand.u32 %s124, 1
          %s466 = smul.addr %s465, 32
          %s467 = scalar_lea.vmem [#allocation5], %s466
          %468 = dma.done %s464, 512
        $region52: #{tpu_custom_call.1} parent=47 // pred_fallthru
          _
      $region48: #{tpu_custom_call.1} parent=5 // pred_fallthru
        _
    $region6: #{tpu_custom_call.1} parent=1 // loop_footer
      %s20 = sadd.s32 1, %s16
    $region7: #{tpu_custom_call.1} parent=1 // loop_footer_branch
      %15 = sbr.rel target = $region3
    $region8: #{tpu_custom_call.1} parent=1 // loop_exit
      _
    %469 = vsyncpa [#allocation3], 1
    %s470 = scalar_lea.sflag [#allocation3], 1
    %471 = vsyncpa %s470, 1
    %472 = vsyncpa [#allocation4], 1
    %s473 = scalar_lea.sflag [#allocation4], 1
    %474 = vsyncpa %s473, 1

</llo_original>
